<compile_context>
chip_gen: v5e
topology: v5e:2x2
jax: 0.10.0
libtpu: 0.0.40
codegen_flags: <defaults>
</compile_context>

<pallas_src>
import functools

import jax
import jax.numpy as jnp
from jax.experimental import pallas as pl
from jax.experimental.pallas import tpu as pltpu


# ----------------------------------------------------------------------------
# Kernels
# ----------------------------------------------------------------------------
def _mean_single_block_kernel(x_ref, o_ref):
    """Whole array resident in VMEM: one reduction, no grid."""
    x = x_ref[...].astype(jnp.float32)                        # (B, S)
    s = jnp.sum(x, axis=-1, keepdims=True)                    # (B, 1)
    o_ref[...] = (s * (1.0 / x.shape[-1])).astype(o_ref.dtype)


def _mean_tiled_kernel(x_ref, o_ref, acc_ref, *, s_total, ts, mask_s):
    """Streaming reduction over the step axis (last grid axis).

    grid = (num_batch_tiles, num_step_tiles); acc_ref is a (TB, 1) f32 VMEM
    scratch resident across the step axis.
    """
    k = pl.program_id(1)

    @pl.when(k == 0)
    def _init():
        acc_ref[...] = jnp.zeros_like(acc_ref)

    x = x_ref[...].astype(jnp.float32)                        # (TB, TS)
    if mask_s:
        # Mask columns beyond the true S (only the last step tile is ragged;
        # for earlier tiles the predicate is all-true and the select is free
        # filler under the memory-bound DMA).
        col = jax.lax.broadcasted_iota(jnp.int32, x.shape, 1) + k * ts
        x = jnp.where(col < s_total, x, 0.0)                  # select => NaN-safe

    acc_ref[...] += jnp.sum(x, axis=-1, keepdims=True)        # (TB, 1)

    @pl.when(k == pl.num_programs(1) - 1)
    def _finalize():
        # Divide by the FULL step count, not the tile size.
        o_ref[...] = (acc_ref[...] * (1.0 / s_total)).astype(o_ref.dtype)


# ----------------------------------------------------------------------------
# Wrapper
# ----------------------------------------------------------------------------
def global_max_pooling_1d(x, *, tb=256, ts=None, single_block_max_bytes=2 << 20):
    """Pallas GlobalMaxPooling1D.forward (channels_last).

    x: (B, S) array.  Returns (B, 1) per-row means, same dtype as x.
    """
    B, S = x.shape
    out_shape = jax.ShapeDtypeStruct((B, 1), x.dtype)
    itemsize = jnp.dtype(x.dtype).itemsize

    # ---- tiny-input path: single block, no grid -----------------------------
    nbytes = x.size * itemsize
    if nbytes <= single_block_max_bytes:
        return pl.pallas_call(
            _mean_single_block_kernel,
            out_shape=out_shape,
            in_specs=[pl.BlockSpec((B, S), lambda: (0, 0))],
            out_specs=pl.BlockSpec((B, 1), lambda: (0, 0)),
        )(x)

    # ---- large-input path: pipelined tiled streaming reduction --------------
    if ts is None:
        # Keep the double-buffered input around 8 MiB irrespective of dtype:
        # f32 -> 4096 lanes, bf16 -> 8192, int8/fp8 -> 16384.
        ts = 4096 * max(1, 4 // itemsize)

    # Clamp tiles to the (8, 128)-aligned envelope of the array.
    tb = min(tb, pl.cdiv(B, 8) * 8)      # multiple of 8 (sublane)
    ts = min(ts, pl.cdiv(S, 128) * 128)  # multiple of 128 (lane)

    kernel = functools.partial(
        _mean_tiled_kernel, s_total=S, ts=ts, mask_s=(S % ts != 0)
    )
    grid = (pl.cdiv(B, tb), pl.cdiv(S, ts))

    return pl.pallas_call(
        kernel,
        out_shape=out_shape,
        grid_spec=pltpu.PrefetchScalarGridSpec(
            num_scalar_prefetch=0,
            grid=grid,
            in_specs=[pl.BlockSpec((tb, ts), lambda i, k: (i, k))],
            # Same output block for every k => accumulator resident over S.
            out_specs=pl.BlockSpec((tb, 1), lambda i, k: (i, 0)),
            scratch_shapes=[pltpu.VMEM((tb, 1), jnp.float32)],
        ),
        compiler_params=pltpu.CompilerParams(
            dimension_semantics=("parallel", "arbitrary"),
        ),
    )(x)


# ----------------------------------------------------------------------------
# Demo / self-check
# ----------------------------------------------------------------------------
if __name__ == "__main__":
    key = jax.random.PRNGKey(0)
    k1, k2, k3 = jax.random.split(key, 3)

    # 1) Tiny shape (as the module is used): exercises the single-block path.
    B1, S1 = 4, 16
    x1 = jax.random.normal(k1, (B1, S1), dtype=jnp.float32)
    out1 = jax.block_until_ready(global_max_pooling_1d(x1))
    ref1 = jnp.mean(x1, axis=1).reshape(B1, 1)
    assert out1.shape == (B1, 1), out1.shape
    assert jnp.allclose(out1, ref1, atol=1e-5, rtol=1e-5), (out1, ref1)

    # 2) Small-but-ragged shape, forced through the tiled/pipelined path
    #    (tests grid, f32 accumulator, step-axis masking, partial batch tile).
    B2, S2 = 24, 300
    x2 = jax.random.normal(k2, (B2, S2), dtype=jnp.float32)
    out2 = jax.block_until_ready(
        global_max_pooling_1d(x2, tb=16, ts=128, single_block_max_bytes=0)
    )
    ref2 = jnp.mean(x2, axis=1).reshape(B2, 1)
    assert out2.shape == (B2, 1), out2.shape
    assert jnp.allclose(out2, ref2, atol=1e-5, rtol=1e-5), (out2, ref2)

    # 3) bf16 input through the tiled path (exercises upcast + f32 accumulate).
    B3, S3 = 16, 512
    x3 = jax.random.normal(k3, (B3, S3), dtype=jnp.bfloat16)
    out3 = jax.block_until_ready(
        global_max_pooling_1d(x3, tb=8, ts=256, single_block_max_bytes=0)
    )
    ref3 = jnp.mean(x3.astype(jnp.float32), axis=1).reshape(B3, 1)
    assert out3.shape == (B3, 1), out3.shape
    assert out3.dtype == x3.dtype, out3.dtype
    assert jnp.allclose(out3.astype(jnp.float32), ref3, atol=1e-2, rtol=1e-2)

    print("KERNEL_OK")
</pallas_src>

<mosaic_0001>
module attributes {stable_mosaic.version = 11 : i64} {
  func.func @_mean_single_block_kernel(%arg0: memref<4x16xf32, #tpu.memory_space<vmem>>, %arg1: memref<4x1xf32, #tpu.memory_space<vmem>>) attributes {dimension_semantics = [], scalar_prefetch = 0 : i64, scratch_operands = 0 : i64, tpu.core_type = #tpu.core_type<tc>} {
    %c0 = arith.constant 0 : index
    %c0_0 = arith.constant 0 : index
    %0 = vector.load %arg0[%c0, %c0_0] : memref<4x16xf32, #tpu.memory_space<vmem>>, vector<4x16xf32>
    %cst = arith.constant dense<0.000000e+00> : vector<4xf32>
    %1 = vector.multi_reduction <add>, %0, %cst [1] : vector<4x16xf32> to vector<4xf32>
    %2 = vector.shape_cast %1 : vector<4xf32> to vector<4x1xf32>
    %cst_1 = arith.constant 6.250000e-02 : f32
    %3 = vector.broadcast %cst_1 : f32 to vector<4x1xf32>
    %4 = arith.mulf %2, %3 : vector<4x1xf32>
    %c0_2 = arith.constant 0 : index
    %c0_3 = arith.constant 0 : index
    %5 = vector.load %arg1[%c0_2, %c0_3] : memref<4x1xf32, #tpu.memory_space<vmem>>, vector<4x1xf32>
    tpu.vector_store %arg1[%c0_2, %c0_3], %4 {strides = array<i32>} : memref<4x1xf32, #tpu.memory_space<vmem>>, vector<4x1xf32>,
    return
  }
}

</mosaic_0001>

<llo_original>
// kernel: tpu_custom_call.1
$region0: #{tpu_custom_call.1}
  #allocation0 [shape = 'u32[]', space=smem, size = 0x4, offset = 0x4, fixed_abs, tag = 'smem constant byte address 0x4 - core index']
  #allocation1 [shape = 'u32[72,128]{1,0:T(1,128)}', space=vmem, size = 0x9000, scoped, tag = 'internal scratch']
  %s0 = inlined_call_operand.hbm [shape: f32[4,16], index: 0, kind: input, shape index: {}]
  %s1 = inlined_call_operand.vmem [shape: f32[4,1], index: 1, kind: output, shape index: {}]
  %s2 = sld [smem:[#allocation0]]
  $region18: #{tpu_custom_call.1} parent=0
    _
  %s4 = ssub.s32 1, %s2
  %s5 = scalar_select 0, %s4, %s2
  $region1: #{tpu_custom_call.1} parent=0
    #allocation2 [shape = 'u8[2048]{0}', space=vmem, size = 0x800, scoped, tag = 'input window, operand 0, single buffered']
    #allocation3 [shape = 's32[1]{0}', space=sflag, size = 0x4, scoped, tag = 'scoped memory for tpu_custom_call.1']
    %6 = vsyncpa [#allocation3], 0
    // Predicated region
    $region2: #{tpu_custom_call.1} parent=1 // pred_check
      _
    $region3: #{tpu_custom_call.1} parent=1 // pred_check_branch
      %8 = sbr.rel (0) target = $region5
    $region4: #{tpu_custom_call.1} parent=1 // pred_region
      %10 = vsyncadd [#allocation3], 0
      %s12 = sshll.u32 %s0, 4
      %s13 = int_to_ptr.hbm [resolvable:$true] %s12
      %s14 = sshll.u32 [#allocation2], 4
      %s15 = int_to_ptr.vmem [resolvable:$true] %s14
      %17 = dma.hbm_to_vmem [thread:$0]  %s13, 64, %s15, [#allocation3]
    $region5: #{tpu_custom_call.1} parent=1 // pred_fallthru
      _
    // Predicated region
    $region6: #{tpu_custom_call.1} parent=1 // pred_check
      _
    $region7: #{tpu_custom_call.1} parent=1 // pred_check_branch
      %19 = sbr.rel (0) target = $region9
    $region8: #{tpu_custom_call.1} parent=1 // pred_region
      %21 = dma.done [#allocation3], 64
    $region9: #{tpu_custom_call.1} parent=1 // pred_fallthru
      _
    %v22 = vld [vmem:[#allocation2] sm:$0xf]
    %vm23 = vcmask 125952
    %v24 = vsel %vm23, %v22, 0.0
    %25 = vadd.xlane.f32.xlu0 %v24
    %v26 = vpop.xlane.xlu0 %25
    %v27 = vmul.f32 %v26, 0.0625
    %vm28 = vcmask 3072
    %29 = vst.msk [vmem:[%s1] sm:$0xf] %vm28, %v27
    // Predicated region
    $region10: #{tpu_custom_call.1} parent=1 // pred_check
      _
    $region11: #{tpu_custom_call.1} parent=1 // pred_check_branch
      %31 = sbr.rel (0) target = $region13
    $region12: #{tpu_custom_call.1} parent=1 // pred_region
      _
    $region13: #{tpu_custom_call.1} parent=1 // pred_fallthru
      _
    // Predicated region
    $region14: #{tpu_custom_call.1} parent=1 // pred_check
      _
    $region15: #{tpu_custom_call.1} parent=1 // pred_check_branch
      %33 = sbr.rel (0) target = $region17
    $region16: #{tpu_custom_call.1} parent=1 // pred_region
      _
    $region17: #{tpu_custom_call.1} parent=1 // pred_fallthru
      _
    %34 = vsyncpa [#allocation3], 1

</llo_original>
